<compile_context>
chip_gen: v7x
topology: tpu7x:2x2x1
jax: 0.10.0
libtpu: 0.0.40
codegen_flags: <defaults>
</compile_context>

<pallas_src>
import functools

import jax
import jax.numpy as jnp
import numpy as np
from jax.experimental import pallas as pl
from jax.experimental.pallas import tpu as pltpu


# ----------------------------- config (matches PtConfig fields used) -----------------------------
DIM_Z = 32
DIM_G = 16
BINARY_INITIALIZER_RANGE = 0.02
BINARY_FACTOR_SCALING = 2.0
REGULARIZE_G = 0.5
POTENTIAL_FUNC_G = "exp"          # one of 'exp' | 'abs' | 'square'
POTENTIAL_EPS = 1e-6

LANES = 128


def _round_up(x, m):
    return (x + m - 1) // m * m


def _device_kind():
    try:
        return jax.devices()[0].device_kind.lower()
    except Exception:
        return ""


# ----------------------------------------- kernel ------------------------------------------------
def _topic_kernel(x_ref, w1_ref, w2_ref, bsum_ref, out_ref, *, potential, eps):
    """One lane-dense row tile.

    x_ref   : (tp, pack*dim_z)          packed qz rows (pack logical rows per physical row)
    w1_ref  : (pack*dim_z, pack*dim_g)  kron(I, W.T) with scale/regularize_g folded in
    w2_ref  : (pack*dim_g, pack*dim_z)  kron(I, W)   with scale folded in
    bsum_ref: (pack*dim_g, pack*dim_g)  kron(I, ones) -> per-segment sum broadcast (MXU)
    """
    x = x_ref[...].astype(jnp.float32)

    # First linear: scale / regularize_g already folded into W1 (no extra VPU pass).
    qg = jnp.dot(x, w1_ref[...], preferred_element_type=jnp.float32)

    if potential == "exp":
        # Softmax per dim_g-wide lane segment. A per-row (global) max is constant within
        # every segment and softmax is shift-invariant per segment, so a single XLU reduce
        # replaces the old masked per-segment-max loop. Logits here are O(1), far below
        # the ~88 gap that could underflow a whole segment.
        m = jnp.max(qg, axis=-1, keepdims=True)
        e = jnp.exp(qg - m)
        denom = jnp.dot(e, bsum_ref[...], preferred_element_type=jnp.float32)
        qg = e * pl.reciprocal(denom, approx=False)
    elif potential == "abs":
        # relu + per-segment L1 normalize. EUP is idle here -> approx reciprocal (free
        # bundle slot) refined by one Newton step to keep full fp32 precision.
        e = jnp.maximum(qg, 0.0)
        denom = jnp.maximum(
            jnp.dot(e, bsum_ref[...], preferred_element_type=jnp.float32), eps)
        r = pl.reciprocal(denom, approx=True)
        r = r * (2.0 - denom * r)
        qg = e * r
    elif potential == "square":
        e = qg * qg
        denom = jnp.maximum(
            jnp.dot(e, bsum_ref[...], preferred_element_type=jnp.float32), eps)
        r = pl.reciprocal(denom, approx=True)
        r = r * (2.0 - denom * r)
        qg = e * r
    else:
        raise ValueError(f"unknown potential {potential}")

    # Second linear: scale folded into W2; lane-dense (tp, pack*dim_z) store.
    out_ref[...] = jnp.dot(
        qg, w2_ref[...], preferred_element_type=jnp.float32).astype(out_ref.dtype)


# ---------------------------------------- wrapper ------------------------------------------------
def pt_topic_modeling(qz, binary_factor, *, scale=BINARY_FACTOR_SCALING, reg=REGULARIZE_G,
                      potential=POTENTIAL_FUNC_G, eps=POTENTIAL_EPS,
                      block_packed_rows=2048, pack=None):
    """qz: (..., dim_z); binary_factor: (dim_g, dim_z). Returns (..., dim_z) in qz.dtype."""
    orig_shape = qz.shape
    dim_z = orig_shape[-1]
    dim_g = binary_factor.shape[0]
    assert binary_factor.shape[1] == dim_z

    kind = _device_kind()

    # Packing factor (logical rows folded into one lane-dense physical row).
    #  * v6e/v7x: pack = 128//dim_g (=8) so the (tp, pack*dim_g) activation intermediates
    #    use all 128 lanes.
    #  * v5e (and unknown): pack = 128//dim_z (=4); the denser fp32 block-diagonal matmuls
    #    at pack=8 would push v5e MXU-bound.
    if pack is None:
        if any(t in kind for t in ("v6", "v7")) and dim_g > 0 and LANES % dim_g == 0:
            pack = LANES // dim_g
        elif LANES % dim_z == 0:
            pack = LANES // dim_z
        else:
            pack = 1

    qz2d = qz.reshape(-1, dim_z)
    m = qz2d.shape[0]

    # Only pad when m is not a multiple of `pack` (at most pack-1 rows). In the common
    # case (m % pack == 0) there are zero extra HBM copies: the packed reshape is a free
    # row-major reshape and the output reshapes straight back.
    m_rem = m % pack
    if m_rem:
        qz2d = jnp.pad(qz2d, ((0, pack - m_rem), (0, 0)))
    mp = qz2d.shape[0] // pack
    x_packed = qz2d.reshape(mp, pack * dim_z)

    # Row tile in packed rows. Default 2048 = 1 MiB (pack=4) / 2 MiB (pack=8) fp32 input
    # per grid step: big enough to amortize the ~0.35 us/step pipeline overhead, small
    # enough for default scoped VMEM on all generations with double-buffered I/O.
    # Rounded to 32 so the block's second-minor dim also satisfies bf16/int8 sublane tiling.
    tp = max(32, _round_up(int(block_packed_rows), 32))
    if tp >= mp:
        tp = mp                       # single full-extent block (always a legal block shape)
    grid_n = pl.cdiv(mp, tp)
    # v7x has 2 TensorCores: keep >= 2 grid steps so "parallel" can shard across them.
    if "v7" in kind and grid_n < 2 and mp >= 256:
        tp = _round_up(pl.cdiv(mp, 2), 32)
        grid_n = pl.cdiv(mp, tp)

    # Block-diagonal weights built once outside the kernel: all transposes and the scalar
    # constants (binary_factor_scaling, 1/regularize_g) are folded in here.
    w = binary_factor.astype(jnp.float32)
    eye = jnp.eye(pack, dtype=jnp.float32)
    w1 = jnp.kron(eye, w.T * (float(scale) / float(reg)))          # (pack*dim_z, pack*dim_g)
    w2 = jnp.kron(eye, w * float(scale))                           # (pack*dim_g, pack*dim_z)
    bsum = jnp.kron(eye, jnp.ones((dim_g, dim_g), jnp.float32))    # (pack*dim_g, pack*dim_g)

    kernel = functools.partial(_topic_kernel, potential=potential, eps=float(eps))

    out_packed = pl.pallas_call(
        kernel,
        # Output dtype follows qz.dtype (the PyTorch module casts back to the input dtype).
        out_shape=jax.ShapeDtypeStruct((mp, pack * dim_z), qz.dtype),
        grid_spec=pltpu.PrefetchScalarGridSpec(
            num_scalar_prefetch=0,
            grid=(grid_n,),
            in_specs=[
                pl.BlockSpec((tp, pack * dim_z), lambda i: (i, 0)),            # packed qz
                pl.BlockSpec((pack * dim_z, pack * dim_g), lambda i: (0, 0)),  # W1 (resident)
                pl.BlockSpec((pack * dim_g, pack * dim_z), lambda i: (0, 0)),  # W2 (resident)
                pl.BlockSpec((pack * dim_g, pack * dim_g), lambda i: (0, 0)),  # block-ones
            ],
            out_specs=pl.BlockSpec((tp, pack * dim_z), lambda i: (i, 0)),
        ),
        compiler_params=pltpu.CompilerParams(dimension_semantics=("parallel",)),
    )(x_packed, w1, w2, bsum)

    out2d = out_packed.reshape(mp * pack, dim_z)
    if m_rem:
        out2d = out2d[:m]
    return out2d.reshape(orig_shape)


# --------------------------------------- reference -----------------------------------------------
def _reference(qz, w, scale, reg, potential, eps):
    qg = (qz.astype(jnp.float32) @ w.astype(jnp.float32).T) * scale
    qg = qg / reg
    if potential == "exp":
        qg = jax.nn.softmax(qg, axis=-1)
    elif potential == "abs":
        qg = jnp.maximum(qg, 0.0)
        qg = qg / jnp.maximum(jnp.sum(jnp.abs(qg), axis=-1, keepdims=True), eps)
    else:
        qg = qg * qg
        qg = qg / jnp.maximum(jnp.sum(jnp.abs(qg), axis=-1, keepdims=True), eps)
    return ((qg @ w.astype(jnp.float32)) * scale).astype(qz.dtype)


# ------------------------------------------ main -------------------------------------------------
if __name__ == "__main__":
    key = jax.random.PRNGKey(0)
    k_qz, k_w, k_big, k_grid = jax.random.split(key, 4)

    batch, seq = 2, 8
    qz = jax.random.normal(k_qz, (batch, seq, DIM_Z), dtype=jnp.float32)
    # binary_factor ~ N(0, binary_initializer_range)  (deterministic in-script init)
    binary_factor = (
        jax.random.normal(k_w, (DIM_G, DIM_Z), dtype=jnp.float32) * BINARY_INITIALIZER_RANGE
    )

    # All three potential functions on the small shape (default generation-detected pack).
    for potential in ("exp", "abs", "square"):
        out = jax.block_until_ready(pt_topic_modeling(qz, binary_factor, potential=potential))
        ref = _reference(qz, binary_factor, BINARY_FACTOR_SCALING, REGULARIZE_G,
                         potential, POTENTIAL_EPS)
        np.testing.assert_allclose(np.asarray(out), np.asarray(ref), rtol=1e-5, atol=1e-5)

    # Ragged size (4*333 rows), default settings.
    qz_big = jax.random.normal(k_big, (4, 333, DIM_Z), dtype=jnp.float32)
    ref_big = _reference(qz_big, binary_factor, BINARY_FACTOR_SCALING, REGULARIZE_G,
                         POTENTIAL_FUNC_G, POTENTIAL_EPS)
    out = jax.block_until_ready(pt_topic_modeling(qz_big, binary_factor))
    np.testing.assert_allclose(np.asarray(out), np.asarray(ref_big), rtol=1e-5, atol=1e-5)

    # Both packing variants explicitly (pack=4 dense-x, pack=8 dense-activation) so each
    # code path is validated regardless of the TPU generation running the test; pack=8
    # also exercises the small tail pad (1332 % 8 != 0).
    for pk in (4, 8):
        out = jax.block_until_ready(pt_topic_modeling(qz_big, binary_factor, pack=pk))
        np.testing.assert_allclose(np.asarray(out), np.asarray(ref_big), rtol=1e-5, atol=1e-5)

    # Multi-step grid with a partial final block (no whole-array pad), fp32 and bf16.
    qz_grid = jax.random.normal(k_grid, (3, 700, DIM_Z), dtype=jnp.float32)
    ref_grid = _reference(qz_grid, binary_factor, BINARY_FACTOR_SCALING, REGULARIZE_G,
                          POTENTIAL_FUNC_G, POTENTIAL_EPS)
    out = jax.block_until_ready(
        pt_topic_modeling(qz_grid, binary_factor, block_packed_rows=128, pack=4))
    np.testing.assert_allclose(np.asarray(out), np.asarray(ref_grid), rtol=1e-5, atol=1e-5)

    qz_bf16 = qz_grid.astype(jnp.bfloat16)
    ref_bf16 = _reference(qz_bf16, binary_factor, BINARY_FACTOR_SCALING, REGULARIZE_G,
                          POTENTIAL_FUNC_G, POTENTIAL_EPS)
    out = jax.block_until_ready(
        pt_topic_modeling(qz_bf16, binary_factor, block_packed_rows=128, pack=4))
    np.testing.assert_allclose(np.asarray(out, dtype=np.float32),
                               np.asarray(ref_bf16, dtype=np.float32), rtol=2e-2, atol=1e-4)

    print("KERNEL_OK")
</pallas_src>

<mosaic_0001>
module attributes {stable_mosaic.version = 11 : i64} {
  func.func @_topic_kernel(%arg0: i32, %arg1: memref<4x128xf32, #tpu.memory_space<vmem>>, %arg2: memref<128x64xf32, #tpu.memory_space<vmem>>, %arg3: memref<64x128xf32, #tpu.memory_space<vmem>>, %arg4: memref<64x64xf32, #tpu.memory_space<vmem>>, %arg5: memref<4x128xf32, #tpu.memory_space<vmem>>) attributes {dimension_semantics = [#tpu.dimension_semantics<parallel>], iteration_bounds = array<i64: 1>, scalar_prefetch = 0 : i64, scratch_operands = 0 : i64, tpu.core_type = #tpu.core_type<tc>, window_params = [{transform_indices = @transform_0, window_bounds = array<i64: 4, 128>}, {pipeline_mode = #tpu.pipeline_mode<synchronous>, transform_indices = @transform_1, window_bounds = array<i64: 128, 64>}, {pipeline_mode = #tpu.pipeline_mode<synchronous>, transform_indices = @transform_2, window_bounds = array<i64: 64, 128>}, {pipeline_mode = #tpu.pipeline_mode<synchronous>, transform_indices = @transform_3, window_bounds = array<i64: 64, 64>}, {transform_indices = @transform_4, window_bounds = array<i64: 4, 128>}]} {
    %c0 = arith.constant 0 : index
    %c0_0 = arith.constant 0 : index
    %0 = vector.load %arg1[%c0, %c0_0] : memref<4x128xf32, #tpu.memory_space<vmem>>, vector<4x128xf32>
    %c0_1 = arith.constant 0 : index
    %c0_2 = arith.constant 0 : index
    %1 = vector.load %arg2[%c0_1, %c0_2] : memref<128x64xf32, #tpu.memory_space<vmem>>, vector<128x64xf32>
    %cst = arith.constant dense<0.000000e+00> : vector<4x64xf32>
    %2 = tpu.matmul %0, %1, %cst {dimension_numbers = #tpu.dot_dimension_numbers<[1], [0], [0], [1], [0, 0, 1, 1], [], []>} : vector<4x128xf32>, vector<128x64xf32>, vector<4x64xf32> -> vector<4x64xf32>
    %cst_3 = arith.constant dense<0xFF800000> : vector<4xf32>
    %3 = vector.multi_reduction <maximumf>, %2, %cst_3 [1] : vector<4x64xf32> to vector<4xf32>
    %4 = vector.shape_cast %3 : vector<4xf32> to vector<4x1xf32>
    %5 = vector.broadcast %4 : vector<4x1xf32> to vector<4x64xf32>
    %6 = arith.subf %2, %5 : vector<4x64xf32>
    %7 = math.exp %6 : vector<4x64xf32>
    %c0_4 = arith.constant 0 : index
    %c0_5 = arith.constant 0 : index
    %8 = vector.load %arg4[%c0_4, %c0_5] : memref<64x64xf32, #tpu.memory_space<vmem>>, vector<64x64xf32>
    %cst_6 = arith.constant dense<0.000000e+00> : vector<4x64xf32>
    %9 = tpu.matmul %7, %8, %cst_6 {dimension_numbers = #tpu.dot_dimension_numbers<[1], [0], [0], [1], [0, 0, 1, 1], [], []>} : vector<4x64xf32>, vector<64x64xf32>, vector<4x64xf32> -> vector<4x64xf32>
    %10 = tpu.reciprocal %9 : vector<4x64xf32> -> vector<4x64xf32>
    %11 = arith.mulf %7, %10 : vector<4x64xf32>
    %c0_7 = arith.constant 0 : index
    %c0_8 = arith.constant 0 : index
    %12 = vector.load %arg3[%c0_7, %c0_8] : memref<64x128xf32, #tpu.memory_space<vmem>>, vector<64x128xf32>
    %cst_9 = arith.constant dense<0.000000e+00> : vector<4x128xf32>
    %13 = tpu.matmul %11, %12, %cst_9 {dimension_numbers = #tpu.dot_dimension_numbers<[1], [0], [0], [1], [0, 0, 1, 1], [], []>} : vector<4x64xf32>, vector<64x128xf32>, vector<4x128xf32> -> vector<4x128xf32>
    %c0_10 = arith.constant 0 : index
    %c0_11 = arith.constant 0 : index
    %14 = vector.load %arg5[%c0_10, %c0_11] : memref<4x128xf32, #tpu.memory_space<vmem>>, vector<4x128xf32>
    tpu.vector_store %arg5[%c0_10, %c0_11], %13 {strides = array<i32>} : memref<4x128xf32, #tpu.memory_space<vmem>>, vector<4x128xf32>,
    return
  }
  func.func @transform_0(%arg0: i32) -> (i32, i32) {
    %c0_i32 = arith.constant 0 : i32
    %c0_i32_0 = arith.constant 0 : i32
    return %arg0, %c0_i32 : i32, i32
  }
  func.func @transform_1(%arg0: i32) -> (i32, i32) {
    %c0_i32 = arith.constant 0 : i32
    %c0_i32_0 = arith.constant 0 : i32
    %c0_i32_1 = arith.constant 0 : i32
    return %c0_i32, %c0_i32_0 : i32, i32
  }
  func.func @transform_2(%arg0: i32) -> (i32, i32) {
    %c0_i32 = arith.constant 0 : i32
    %c0_i32_0 = arith.constant 0 : i32
    %c0_i32_1 = arith.constant 0 : i32
    return %c0_i32, %c0_i32_0 : i32, i32
  }
  func.func @transform_3(%arg0: i32) -> (i32, i32) {
    %c0_i32 = arith.constant 0 : i32
    %c0_i32_0 = arith.constant 0 : i32
    %c0_i32_1 = arith.constant 0 : i32
    return %c0_i32, %c0_i32_0 : i32, i32
  }
  func.func @transform_4(%arg0: i32) -> (i32, i32) {
    %c0_i32 = arith.constant 0 : i32
    %c0_i32_0 = arith.constant 0 : i32
    return %arg0, %c0_i32 : i32, i32
  }
}

</mosaic_0001>

<llo_original>
// kernel: tpu_custom_call.1
$region0: #{tpu_custom_call.1}
  #allocation0 [shape = 'u32[]', space=smem, size = 0x4, offset = 0x4, fixed_abs, tag = 'smem constant byte address 0x4 - core index']
  #allocation1 [shape = 'u32[144,128]{1,0:T(1,128)}', space=vmem, size = 0x12000, scoped, tag = 'internal scratch']
  %s0 = inlined_call_operand.vmem [shape: f32[4,128], index: 0, kind: input, shape index: {}]
  %s1 = inlined_call_operand.vmem [shape: f32[128,64], index: 1, kind: input, shape index: {}]
  %s2 = inlined_call_operand.vmem [shape: f32[64,128], index: 2, kind: input, shape index: {}]
  %s3 = inlined_call_operand.vmem [shape: f32[64,64], index: 3, kind: input, shape index: {}]
  %s4 = inlined_call_operand.hbm [shape: f32[4,128], index: 4, kind: output, shape index: {}]
  %s5 = sld [smem:[#allocation0]]
  $region26: #{tpu_custom_call.1} parent=0
    _
  %s7 = ssub.s32 1, %s5
  %s8 = scalar_select 0, %s7, %s5
  $region1: #{tpu_custom_call.1} parent=0
    #allocation2 [shape = 'u8[2048]{0}', space=vmem, size = 0x800, scoped, tag = 'output window, operand 0, single buffered']
    #allocation3 [shape = 's32[1]{0}', space=sflag, size = 0x4, scoped, tag = 'scoped memory for tpu_custom_call.1']
    %9 = vsyncpa [#allocation3], 0
    // Predicated region
    $region2: #{tpu_custom_call.1} parent=1 // pred_check
      _
    $region3: #{tpu_custom_call.1} parent=1 // pred_check_branch
      %11 = sbr.rel (0) target = $region5
    $region4: #{tpu_custom_call.1} parent=1 // pred_region
      _
    $region5: #{tpu_custom_call.1} parent=1 // pred_fallthru
      _
    // Predicated region
    $region6: #{tpu_custom_call.1} parent=1 // pred_check
      _
    $region7: #{tpu_custom_call.1} parent=1 // pred_check_branch
      %13 = sbr.rel (0) target = $region9
    $region8: #{tpu_custom_call.1} parent=1 // pred_region
      _
    $region9: #{tpu_custom_call.1} parent=1 // pred_fallthru
      _
    // Predicated region
    $region10: #{tpu_custom_call.1} parent=1 // pred_check
      _
    $region11: #{tpu_custom_call.1} parent=1 // pred_check_branch
      %15 = sbr.rel (0) target = $region13
    $region12: #{tpu_custom_call.1} parent=1 // pred_region
      _
    $region13: #{tpu_custom_call.1} parent=1 // pred_fallthru
      _
    // Predicated region
    $region14: #{tpu_custom_call.1} parent=1 // pred_check
      _
    $region15: #{tpu_custom_call.1} parent=1 // pred_check_branch
      %17 = sbr.rel (0) target = $region17
    $region16: #{tpu_custom_call.1} parent=1 // pred_region
      _
    $region17: #{tpu_custom_call.1} parent=1 // pred_fallthru
      _
    %v18 = vld [vmem:[%s0] sm:$0xf]
    %v19 = vld [vmem:[%s1] sm:$0xff]
    %v20 = vld [vmem:[%s1 + $0x8] sm:$0xff]
    %v21 = vld [vmem:[%s1 + $0x10] sm:$0xff]
    %v22 = vld [vmem:[%s1 + $0x18] sm:$0xff]
    %v23 = vld [vmem:[%s1 + $0x20] sm:$0xff]
    %v24 = vld [vmem:[%s1 + $0x28] sm:$0xff]
    %v25 = vld [vmem:[%s1 + $0x30] sm:$0xff]
    %v26 = vld [vmem:[%s1 + $0x38] sm:$0xff]
    %v27 = vld [vmem:[%s1 + $0x40] sm:$0xff]
    %v28 = vld [vmem:[%s1 + $0x48] sm:$0xff]
    %v29 = vld [vmem:[%s1 + $0x50] sm:$0xff]
    %v30 = vld [vmem:[%s1 + $0x58] sm:$0xff]
    %v31 = vld [vmem:[%s1 + $0x60] sm:$0xff]
    %v32 = vld [vmem:[%s1 + $0x68] sm:$0xff]
    %v33 = vld [vmem:[%s1 + $0x70] sm:$0xff]
    %v34 = vld [vmem:[%s1 + $0x78] sm:$0xff]
    %35 = vmatprep.subr.mxu0 0.0
    %36 = vmatpush1.msra.mxu0 %v19
    %37 = vmatprep.subr.mxu0 0.0
    %38 = vmatpush1.msra.mxu0 %v20
    %39 = vmatprep.subr.mxu0 0.0
    %40 = vmatpush1.msra.mxu0 %v21
    %41 = vmatprep.subr.mxu0 0.0
    %42 = vmatpush1.msra.mxu0 %v22
    %43 = vmatprep.subr.mxu0 0.0
    %44 = vmatpush1.msra.mxu0 %v23
    %45 = vmatprep.subr.mxu0 0.0
    %46 = vmatpush1.msra.mxu0 %v24
    %47 = vmatprep.subr.mxu0 0.0
    %48 = vmatpush1.msra.mxu0 %v25
    %49 = vmatprep.subr.mxu0 0.0
    %50 = vmatpush1.msra.mxu0 %v26
    %51 = vmatprep.subr.mxu0 0.0
    %52 = vmatpush1.msra.mxu0 %v27
    %53 = vmatprep.subr.mxu0 0.0
    %54 = vmatpush1.msra.mxu0 %v28
    %55 = vmatprep.subr.mxu0 0.0
    %56 = vmatpush1.msra.mxu0 %v29
    %57 = vmatprep.subr.mxu0 0.0
    %58 = vmatpush1.msra.mxu0 %v30
    %59 = vmatprep.subr.mxu0 0.0
    %60 = vmatpush1.msra.mxu0 %v31
    %61 = vmatprep.subr.mxu0 0.0
    %62 = vmatpush1.msra.mxu0 %v32
    %63 = vmatprep.subr.mxu0 0.0
    %64 = vmatpush1.msra.mxu0 %v33
    %65 = vmatprep.subr.mxu0 0.0
    %66 = vmatpush1.msra.mxu0 %v34
    %67 = vmatprep.subr.mxu0 0.0
    %68 = vmatpush1.msra.mxu0 0.0
    %69 = vmatprep.subr.mxu0 0.0
    %70 = vmatpush1.msra.mxu0 0.0
    %71 = vmatprep.subr.mxu0 0.0
    %72 = vmatpush1.msra.mxu0 0.0
    %73 = vmatprep.subr.mxu0 0.0
    %74 = vmatpush1.msra.mxu0 0.0
    %75 = vmatprep.subr.mxu0 0.0
    %76 = vmatpush1.msra.mxu0 0.0
    %77 = vmatprep.subr.mxu0 0.0
    %78 = vmatpush1.msra.mxu0 0.0
    %79 = vmatprep.subr.mxu0 0.0
    %80 = vmatpush1.msra.mxu0 0.0
    %81 = vmatprep.subr.mxu0 0.0
    %82 = vmatpush1.msra.mxu0 0.0
    %83 = vmatprep.subr.mxu0 0.0
    %84 = vmatpush1.msra.mxu0 0.0
    %85 = vmatprep.subr.mxu0 0.0
    %86 = vmatpush1.msra.mxu0 0.0
    %87 = vmatprep.subr.mxu0 0.0
    %88 = vmatpush1.msra.mxu0 0.0
    %89 = vmatprep.subr.mxu0 0.0
    %90 = vmatpush1.msra.mxu0 0.0
    %91 = vmatprep.subr.mxu0 0.0
    %92 = vmatpush1.msra.mxu0 0.0
    %93 = vmatprep.subr.mxu0 0.0
    %94 = vmatpush1.msra.mxu0 0.0
    %95 = vmatprep.subr.mxu0 0.0
    %96 = vmatpush1.msra.mxu0 0.0
    %97 = vmatprep.subr.mxu0 0.0
    %98 = vmatpush1.msra.mxu0 0.0
    %99 = vmatprep.mubr.f32.mxu0 0.0
    %100 = vmatmul.mubr.f32.gmra.mrb[0].mxu0 %v18
    %v101 = vpop.f32.mrb[0].mxu0
    %v102 = vadd.f32 0.0, %v101
    %v103 = vpop.f32.mrb[0].mxu0
    %104 = vdwg.mxu0
    %vm105 = vcmask 519168
    %v106 = vsel %vm105, %v102, -inf
    %107 = vmax.xlane.f32.xlu0 %v106
    %v108 = vpop.xlane.xlu0 %107
    %v109 = vsub.f32 %v102, %v108
    %v110 = vmul.f32 %v109, 1.442695
    %v111 = vpow.pop %v110
    %v112 = vld [vmem:[%s3] sm:$0xff]
    %v113 = vld [vmem:[%s3 + $0x8] sm:$0xff]
    %v114 = vld [vmem:[%s3 + $0x10] sm:$0xff]
    %v115 = vld [vmem:[%s3 + $0x18] sm:$0xff]
    %v116 = vld [vmem:[%s3 + $0x20] sm:$0xff]
    %v117 = vld [vmem:[%s3 + $0x28] sm:$0xff]
    %v118 = vld [vmem:[%s3 + $0x30] sm:$0xff]
    %v119 = vld [vmem:[%s3 + $0x38] sm:$0xff]
    %vm120 = vcmask 523264
    %v122 = vsel %vm120, %v111, 0
    %124 = vmatprep.subr.mxu0 0.0
    %125 = vmatpush1.msra.mxu0 %v112
    %126 = vmatprep.subr.mxu0 0.0
    %127 = vmatpush1.msra.mxu0 %v113
    %128 = vmatprep.subr.mxu0 0.0
    %129 = vmatpush1.msra.mxu0 %v114
    %130 = vmatprep.subr.mxu0 0.0
    %131 = vmatpush1.msra.mxu0 %v115
    %132 = vmatprep.subr.mxu0 0.0
    %133 = vmatpush1.msra.mxu0 %v116
    %134 = vmatprep.subr.mxu0 0.0
    %135 = vmatpush1.msra.mxu0 %v117
    %136 = vmatprep.subr.mxu0 0.0
    %137 = vmatpush1.msra.mxu0 %v118
    %138 = vmatprep.subr.mxu0 0.0
    %139 = vmatpush1.msra.mxu0 %v119
    %140 = vmatprep.subr.mxu0 0.0
    %141 = vmatpush1.msra.mxu0 0.0
    %142 = vmatprep.subr.mxu0 0.0
    %143 = vmatpush1.msra.mxu0 0.0
    %144 = vmatprep.subr.mxu0 0.0
    %145 = vmatpush1.msra.mxu0 0.0
    %146 = vmatprep.subr.mxu0 0.0
    %147 = vmatpush1.msra.mxu0 0.0
    %148 = vmatprep.subr.mxu0 0.0
    %149 = vmatpush1.msra.mxu0 0.0
    %150 = vmatprep.subr.mxu0 0.0
    %151 = vmatpush1.msra.mxu0 0.0
    %152 = vmatprep.subr.mxu0 0.0
    %153 = vmatpush1.msra.mxu0 0.0
    %154 = vmatprep.subr.mxu0 0.0
    %155 = vmatpush1.msra.mxu0 0.0
    %156 = vmatprep.subr.mxu0 0.0
    %157 = vmatpush1.msra.mxu0 0.0
    %158 = vmatprep.subr.mxu0 0.0
    %159 = vmatpush1.msra.mxu0 0.0
    %160 = vmatprep.subr.mxu0 0.0
    %161 = vmatpush1.msra.mxu0 0.0
    %162 = vmatprep.subr.mxu0 0.0
    %163 = vmatpush1.msra.mxu0 0.0
    %164 = vmatprep.subr.mxu0 0.0
    %165 = vmatpush1.msra.mxu0 0.0
    %166 = vmatprep.subr.mxu0 0.0
    %167 = vmatpush1.msra.mxu0 0.0
    %168 = vmatprep.subr.mxu0 0.0
    %169 = vmatpush1.msra.mxu0 0.0
    %170 = vmatprep.subr.mxu0 0.0
    %171 = vmatpush1.msra.mxu0 0.0
    %172 = vmatprep.subr.mxu0 0.0
    %173 = vmatpush1.msra.mxu0 0.0
    %174 = vmatprep.subr.mxu0 0.0
    %175 = vmatpush1.msra.mxu0 0.0
    %176 = vmatprep.subr.mxu0 0.0
    %177 = vmatpush1.msra.mxu0 0.0
    %178 = vmatprep.subr.mxu0 0.0
    %179 = vmatpush1.msra.mxu0 0.0
    %180 = vmatprep.subr.mxu0 0.0
    %181 = vmatpush1.msra.mxu0 0.0
    %182 = vmatprep.subr.mxu0 0.0
    %183 = vmatpush1.msra.mxu0 0.0
    %184 = vmatprep.subr.mxu0 0.0
    %185 = vmatpush1.msra.mxu0 0.0
    %186 = vmatprep.subr.mxu0 0.0
    %187 = vmatpush1.msra.mxu0 0.0
    %188 = vmatprep.mubr.f32.mxu0 0.0
    %189 = vmatmul.mubr.f32.gmra.mrb[0].mxu0 %v122
    %v190 = vpop.f32.mrb[0].mxu0
    %v191 = vadd.f32 0.0, %v190
    %v192 = vpop.f32.mrb[0].mxu0
    %193 = vdwg.mxu0
    %v194 = vrcp.pop %v191
    %v195 = vmul.f32 %v111, %v194
    %v196 = vld [vmem:[%s2] sm:$0xff]
    %v197 = vld [vmem:[%s2 + $0x8] sm:$0xff]
    %v198 = vld [vmem:[%s2 + $0x10] sm:$0xff]
    %v199 = vld [vmem:[%s2 + $0x18] sm:$0xff]
    %v200 = vld [vmem:[%s2 + $0x20] sm:$0xff]
    %v201 = vld [vmem:[%s2 + $0x28] sm:$0xff]
    %v202 = vld [vmem:[%s2 + $0x30] sm:$0xff]
    %v203 = vld [vmem:[%s2 + $0x38] sm:$0xff]
    %v205 = vsel %vm120, %v195, 0
    %207 = vmatprep.subr.mxu0 0.0
    %208 = vmatpush1.msra.mxu0 %v196
    %209 = vmatprep.subr.mxu0 0.0
    %210 = vmatpush1.msra.mxu0 %v197
    %211 = vmatprep.subr.mxu0 0.0
    %212 = vmatpush1.msra.mxu0 %v198
    %213 = vmatprep.subr.mxu0 0.0
    %214 = vmatpush1.msra.mxu0 %v199
    %215 = vmatprep.subr.mxu0 0.0
    %216 = vmatpush1.msra.mxu0 %v200
    %217 = vmatprep.subr.mxu0 0.0
    %218 = vmatpush1.msra.mxu0 %v201
    %219 = vmatprep.subr.mxu0 0.0
    %220 = vmatpush1.msra.mxu0 %v202
    %221 = vmatprep.subr.mxu0 0.0
    %222 = vmatpush1.msra.mxu0 %v203
    %223 = vmatprep.subr.mxu0 0.0
    %224 = vmatpush1.msra.mxu0 0.0
    %225 = vmatprep.subr.mxu0 0.0
    %226 = vmatpush1.msra.mxu0 0.0
    %227 = vmatprep.subr.mxu0 0.0
    %228 = vmatpush1.msra.mxu0 0.0
    %229 = vmatprep.subr.mxu0 0.0
    %230 = vmatpush1.msra.mxu0 0.0
    %231 = vmatprep.subr.mxu0 0.0
    %232 = vmatpush1.msra.mxu0 0.0
    %233 = vmatprep.subr.mxu0 0.0
    %234 = vmatpush1.msra.mxu0 0.0
    %235 = vmatprep.subr.mxu0 0.0
    %236 = vmatpush1.msra.mxu0 0.0
    %237 = vmatprep.subr.mxu0 0.0
    %238 = vmatpush1.msra.mxu0 0.0
    %239 = vmatprep.subr.mxu0 0.0
    %240 = vmatpush1.msra.mxu0 0.0
    %241 = vmatprep.subr.mxu0 0.0
    %242 = vmatpush1.msra.mxu0 0.0
    %243 = vmatprep.subr.mxu0 0.0
    %244 = vmatpush1.msra.mxu0 0.0
    %245 = vmatprep.subr.mxu0 0.0
    %246 = vmatpush1.msra.mxu0 0.0
    %247 = vmatprep.subr.mxu0 0.0
    %248 = vmatpush1.msra.mxu0 0.0
    %249 = vmatprep.subr.mxu0 0.0
    %250 = vmatpush1.msra.mxu0 0.0
    %251 = vmatprep.subr.mxu0 0.0
    %252 = vmatpush1.msra.mxu0 0.0
    %253 = vmatprep.subr.mxu0 0.0
    %254 = vmatpush1.msra.mxu0 0.0
    %255 = vmatprep.subr.mxu0 0.0
    %256 = vmatpush1.msra.mxu0 0.0
    %257 = vmatprep.subr.mxu0 0.0
    %258 = vmatpush1.msra.mxu0 0.0
    %259 = vmatprep.subr.mxu0 0.0
    %260 = vmatpush1.msra.mxu0 0.0
    %261 = vmatprep.subr.mxu0 0.0
    %262 = vmatpush1.msra.mxu0 0.0
    %263 = vmatprep.subr.mxu0 0.0
    %264 = vmatpush1.msra.mxu0 0.0
    %265 = vmatprep.subr.mxu0 0.0
    %266 = vmatpush1.msra.mxu0 0.0
    %267 = vmatprep.subr.mxu0 0.0
    %268 = vmatpush1.msra.mxu0 0.0
    %269 = vmatprep.subr.mxu0 0.0
    %270 = vmatpush1.msra.mxu0 0.0
    %271 = vmatprep.mubr.f32.mxu0 0.0
    %272 = vmatmul.mubr.f32.gmra.mrb[0].mxu0 %v205
    %v273 = vpop.f32.mrb[0].mxu0
    %v274 = vadd.f32 0.0, %v273
    %v275 = vpop.f32.mrb[0].mxu0
    %276 = vdwg.mxu0
    %277 = vst [vmem:[#allocation2] sm:$0xf] %v274
    // Predicated region
    $region18: #{tpu_custom_call.1} parent=1 // pred_check
      _
    $region19: #{tpu_custom_call.1} parent=1 // pred_check_branch
      %279 = sbr.rel (0) target = $region21
    $region20: #{tpu_custom_call.1} parent=1 // pred_region
      %s281 = ssub.s32 64, 64
      %282 = vsyncadd [#allocation3], %s281
      %s284 = sshll.u32 [#allocation2], 4
      %s285 = int_to_ptr.vmem [resolvable:$true] %s284
      %287 = dma.vmem_to_hbm [thread:$0]  %s285, 64, %s4, [#allocation3]
    $region21: #{tpu_custom_call.1} parent=1 // pred_fallthru
      _
    // Predicated region
    $region22: #{tpu_custom_call.1} parent=1 // pred_check
      _
    $region23: #{tpu_custom_call.1} parent=1 // pred_check_branch
      %289 = sbr.rel (0) target = $region25
    $region24: #{tpu_custom_call.1} parent=1 // pred_region
      %290 = dma.done [#allocation3], 64
    $region25: #{tpu_custom_call.1} parent=1 // pred_fallthru
      _
    %291 = vsyncpa [#allocation3], 1

</llo_original>
